<compile_context>
chip_gen: v7x
topology: tpu7x:2x2x1
jax: 0.10.0
libtpu: 0.0.40
codegen_flags: <defaults>
</compile_context>

<pallas_src>
import jax
import jax.numpy as jnp
from jax import lax
from jax.experimental import pallas as pl
from jax.experimental.pallas import tpu as pltpu

MIB = 1024 * 1024


def _vmem_plan():
    """(resident_budget_bytes, vmem_limit_bytes, min_grid_steps) per TPU gen."""
    kind = ""
    try:
        kind = jax.devices()[0].device_kind.lower()
    except Exception:
        pass
    big_vmem = any(t in kind for t in ("v4", "v5", "v6"))  # 128 MiB VMEM parts
    if big_vmem:
        # 1 TensorCore per chip; raise the small scoped default explicitly.
        return 52 * MIB, 64 * MIB, 2
    # v7x (64 MiB VMEM, 2 TensorCores) or unknown: be conservative, keep >=4 steps.
    return 32 * MIB, 40 * MIB, 4


def _round_up(v, m):
    return -(-v // m) * m


def squeeze_excite(x, w1, b1, w2, b2, *, lt_max=None):
    """x: (B, C, L); w1: (Ci, C); b1: (Ci, 1); w2: (C, Ci); b2: (C, 1)."""
    B, C, L = x.shape
    Ci = w1.shape[0]
    io_dtype = x.dtype
    itemsize = x.dtype.itemsize

    # ---- fold cumulative-channel-mean into the first conv weight (offline) --
    #   (w1 @ diag(1/(k+1)) @ tril_ones)[i, j] = sum_{c >= j} w1[i, c] / (c+1)
    denom = jnp.arange(1, C + 1, dtype=jnp.float32)
    w1_eff = jnp.cumsum((w1.astype(jnp.float32) / denom[None, :])[:, ::-1],
                        axis=1)[:, ::-1]

    # Feed the MXU native-dtype operands; keep f32 robust via HIGHEST precision.
    if io_dtype == jnp.bfloat16:
        mat_dtype, precision = jnp.bfloat16, None
    else:
        mat_dtype, precision = jnp.float32, lax.Precision.HIGHEST
    w1k = w1_eff.astype(mat_dtype)
    w2k = w2.astype(mat_dtype)
    b1k = b1.astype(jnp.float32)
    b2k = b2.astype(jnp.float32)

    # ---- generation- and dtype-aware time-tile size --------------------------
    budget, vmem_limit, min_steps = _vmem_plan()
    # Resident bytes per time column: double-buffered in + out blocks (I/O
    # dtype) plus f32 intermediates (h, silu(h), g, gate, upcast x, product).
    bytes_per_col = 4 * C * itemsize + (2 * Ci + 4 * C) * 4
    lt_budget = max(128, (budget // bytes_per_col) // 128 * 128)
    # Keep enough grid steps for pipelining / both v7x TensorCores.
    n_l_min = max(1, -(-min_steps // B))
    lt_split = max(128, _round_up(-(-L // n_l_min), 128))
    Lt = max(128, min(lt_budget, lt_split))
    if lt_max is not None:                      # test hook: force multi-tile grid
        Lt = max(128, min(Lt, (lt_max // 128) * 128))
    n_l = pl.cdiv(L, Lt)                        # ragged tail handled by Pallas

    def kernel(x_ref, w1_ref, b1_ref, w2_ref, b2_ref, o_ref):
        x_blk = x_ref[0]                                            # (C, Lt), io dtype
        # First 1x1 conv with the cumulative-mean fold baked into w1_eff.
        h = jnp.dot(w1_ref[...], x_blk,
                    preferred_element_type=jnp.float32,
                    precision=precision) + b1_ref[...]              # (Ci, Lt) f32
        h = h * jax.nn.sigmoid(h)                                   # SiLU (f32)
        g = jnp.dot(w2_ref[...], h.astype(w2_ref.dtype),
                    preferred_element_type=jnp.float32,
                    precision=precision) + b2_ref[...]              # (C, Lt) f32
        gate = jax.nn.sigmoid(g)
        o_ref[0] = (x_blk.astype(jnp.float32) * gate).astype(o_ref.dtype)

    return pl.pallas_call(
        kernel,
        out_shape=jax.ShapeDtypeStruct((B, C, L), io_dtype),
        grid_spec=pltpu.PrefetchScalarGridSpec(
            num_scalar_prefetch=0,
            grid=(B, n_l),
            in_specs=[
                pl.BlockSpec((1, C, Lt), lambda b, l: (b, 0, l)),
                # constant index_maps -> weights/biases stay VMEM-resident
                pl.BlockSpec((Ci, C), lambda b, l: (0, 0)),
                pl.BlockSpec((Ci, 1), lambda b, l: (0, 0)),
                pl.BlockSpec((C, Ci), lambda b, l: (0, 0)),
                pl.BlockSpec((C, 1), lambda b, l: (0, 0)),
            ],
            out_specs=pl.BlockSpec((1, C, Lt), lambda b, l: (b, 0, l)),
        ),
        compiler_params=pltpu.CompilerParams(
            dimension_semantics=("parallel", "parallel"),
            vmem_limit_bytes=vmem_limit),
    )(x, w1k, b1k, w2k, b2k)


def squeeze_excite_ref(x, w1, b1, w2, b2):
    """Pure-JAX reference mirroring the PyTorch forward exactly (f32 math)."""
    C = x.shape[-2]
    xf = x.astype(jnp.float32)
    cum_mean = jnp.cumsum(xf, axis=-2) / jnp.arange(1, C + 1,
                                                    dtype=jnp.float32)[:, None]
    h = jnp.einsum('ic,bcl->bil', w1, cum_mean) + b1[None]
    h = h * jax.nn.sigmoid(h)
    g = jnp.einsum('ci,bil->bcl', w2, h) + b2[None]
    return xf * jax.nn.sigmoid(g)


if __name__ == "__main__":
    # Module config: SqueezeExcite(dim=16) -> dim_inner = max(8, 16 // 4) = 8
    dim = 16
    dim_inner = max(8, dim // 4)
    B, L = 2, 256

    key = jax.random.PRNGKey(0)
    kx, kw1, kb1, kw2, kb2, kx2 = jax.random.split(key, 6)

    x = jax.random.normal(kx, (B, dim, L), dtype=jnp.float32)
    bound1 = 1.0 / (dim ** 0.5)
    w1 = jax.random.uniform(kw1, (dim_inner, dim), jnp.float32, -bound1, bound1)
    b1 = jax.random.uniform(kb1, (dim_inner, 1), jnp.float32, -bound1, bound1)
    bound2 = 1.0 / (dim_inner ** 0.5)
    w2 = jax.random.uniform(kw2, (dim, dim_inner), jnp.float32, -bound2, bound2)
    b2 = jax.random.uniform(kb2, (dim, 1), jnp.float32, -bound2, bound2)

    # 1) f32 path (tile size from the VMEM budget).
    out = jax.block_until_ready(squeeze_excite(x, w1, b1, w2, b2))
    ref = squeeze_excite_ref(x, w1, b1, w2, b2)
    assert out.shape == (B, dim, L) and out.dtype == jnp.float32
    assert jnp.allclose(out, ref, atol=1e-4, rtol=1e-4), "f32 mismatch"

    # 2) Ragged L with a forced multi-tile grid: exercises the in-kernel
    #    edge-block handling (no wrapper pad/slice; Pallas masks the store).
    x2 = jax.random.normal(kx2, (B, dim, 200), dtype=jnp.float32)
    out2 = jax.block_until_ready(squeeze_excite(x2, w1, b1, w2, b2, lt_max=128))
    ref2 = squeeze_excite_ref(x2, w1, b1, w2, b2)
    assert out2.shape == (B, dim, 200)
    assert jnp.allclose(out2, ref2, atol=1e-4, rtol=1e-4), "ragged/tiled mismatch"

    # 3) bf16 HBM I/O: bf16 MXU operands, f32 activation math, bf16 output.
    xb = x.astype(jnp.bfloat16)
    outb = jax.block_until_ready(squeeze_excite(xb, w1, b1, w2, b2))
    refb = squeeze_excite_ref(xb, w1, b1, w2, b2)
    assert outb.dtype == jnp.bfloat16
    assert jnp.allclose(outb.astype(jnp.float32), refb,
                        atol=2e-2, rtol=2e-2), "bf16 mismatch"

    print("KERNEL_OK")
</pallas_src>

<mosaic_0001>
module attributes {stable_mosaic.version = 11 : i64} {
  func.func @kernel(%arg0: i32, %arg1: i32, %arg2: memref<1x16x128xf32, #tpu.memory_space<vmem>>, %arg3: memref<8x16xf32, #tpu.memory_space<vmem>>, %arg4: memref<8x1xf32, #tpu.memory_space<vmem>>, %arg5: memref<16x8xf32, #tpu.memory_space<vmem>>, %arg6: memref<16x1xf32, #tpu.memory_space<vmem>>, %arg7: memref<1x16x128xf32, #tpu.memory_space<vmem>>) attributes {dimension_semantics = [#tpu.dimension_semantics<parallel>, #tpu.dimension_semantics<parallel>], iteration_bounds = array<i64: 2, 2>, scalar_prefetch = 0 : i64, scratch_operands = 0 : i64, tpu.core_type = #tpu.core_type<tc>, window_params = [{transform_indices = @transform_0, window_bounds = array<i64: 1, 16, 128>}, {pipeline_mode = #tpu.pipeline_mode<synchronous>, transform_indices = @transform_1, window_bounds = array<i64: 8, 16>}, {pipeline_mode = #tpu.pipeline_mode<synchronous>, transform_indices = @transform_2, window_bounds = array<i64: 8, 1>}, {pipeline_mode = #tpu.pipeline_mode<synchronous>, transform_indices = @transform_3, window_bounds = array<i64: 16, 8>}, {pipeline_mode = #tpu.pipeline_mode<synchronous>, transform_indices = @transform_4, window_bounds = array<i64: 16, 1>}, {transform_indices = @transform_5, window_bounds = array<i64: 1, 16, 128>}]} {
    %c0 = arith.constant 0 : index
    %c0_0 = arith.constant 0 : index
    %c0_1 = arith.constant 0 : index
    %0 = vector.load %arg2[%c0, %c0_0, %c0_1] : memref<1x16x128xf32, #tpu.memory_space<vmem>>, vector<1x16x128xf32>
    %1 = vector.shape_cast %0 : vector<1x16x128xf32> to vector<16x128xf32>
    %c0_2 = arith.constant 0 : index
    %c0_3 = arith.constant 0 : index
    %2 = vector.load %arg3[%c0_2, %c0_3] : memref<8x16xf32, #tpu.memory_space<vmem>>, vector<8x16xf32>
    %cst = arith.constant dense<0.000000e+00> : vector<8x128xf32>
    %3 = tpu.matmul %2, %1, %cst {dimension_numbers = #tpu.dot_dimension_numbers<[1], [0], [0], [1], [0, 0, 1, 1], [], []>, precision = #tpu.contract_precision<fp32>} : vector<8x16xf32>, vector<16x128xf32>, vector<8x128xf32> -> vector<8x128xf32>
    %c0_4 = arith.constant 0 : index
    %c0_5 = arith.constant 0 : index
    %4 = vector.load %arg4[%c0_4, %c0_5] : memref<8x1xf32, #tpu.memory_space<vmem>>, vector<8x1xf32>
    %5 = vector.broadcast %4 : vector<8x1xf32> to vector<8x128xf32>
    %6 = arith.addf %3, %5 : vector<8x128xf32>
    %7 = arith.negf %6 : vector<8x128xf32>
    %8 = math.exp %7 : vector<8x128xf32>
    %cst_6 = arith.constant 1.000000e+00 : f32
    %9 = vector.broadcast %cst_6 : f32 to vector<8x128xf32>
    %10 = arith.addf %9, %8 : vector<8x128xf32>
    %11 = arith.divf %9, %10 : vector<8x128xf32>
    %12 = arith.mulf %6, %11 : vector<8x128xf32>
    %c0_7 = arith.constant 0 : index
    %c0_8 = arith.constant 0 : index
    %13 = vector.load %arg5[%c0_7, %c0_8] : memref<16x8xf32, #tpu.memory_space<vmem>>, vector<16x8xf32>
    %cst_9 = arith.constant dense<0.000000e+00> : vector<16x128xf32>
    %14 = tpu.matmul %13, %12, %cst_9 {dimension_numbers = #tpu.dot_dimension_numbers<[1], [0], [0], [1], [0, 0, 1, 1], [], []>, precision = #tpu.contract_precision<fp32>} : vector<16x8xf32>, vector<8x128xf32>, vector<16x128xf32> -> vector<16x128xf32>
    %c0_10 = arith.constant 0 : index
    %c0_11 = arith.constant 0 : index
    %15 = vector.load %arg6[%c0_10, %c0_11] : memref<16x1xf32, #tpu.memory_space<vmem>>, vector<16x1xf32>
    %16 = vector.broadcast %15 : vector<16x1xf32> to vector<16x128xf32>
    %17 = arith.addf %14, %16 : vector<16x128xf32>
    %18 = arith.negf %17 : vector<16x128xf32>
    %19 = math.exp %18 : vector<16x128xf32>
    %cst_12 = arith.constant 1.000000e+00 : f32
    %20 = vector.broadcast %cst_12 : f32 to vector<16x128xf32>
    %21 = arith.addf %20, %19 : vector<16x128xf32>
    %22 = arith.divf %20, %21 : vector<16x128xf32>
    %23 = arith.mulf %1, %22 : vector<16x128xf32>
    %c0_13 = arith.constant 0 : index
    %c0_14 = arith.constant 0 : index
    %c0_15 = arith.constant 0 : index
    %24 = vector.load %arg7[%c0_13, %c0_14, %c0_15] : memref<1x16x128xf32, #tpu.memory_space<vmem>>, vector<1x16x128xf32>
    %25 = vector.shape_cast %24 : vector<1x16x128xf32> to vector<16x128xf32>
    %26 = vector.shape_cast %23 : vector<16x128xf32> to vector<1x16x128xf32>
    tpu.vector_store %arg7[%c0_13, %c0_14, %c0_15], %26 {strides = array<i32>} : memref<1x16x128xf32, #tpu.memory_space<vmem>>, vector<1x16x128xf32>,
    return
  }
  func.func @transform_0(%arg0: i32, %arg1: i32) -> (i32, i32, i32) {
    %c0_i32 = arith.constant 0 : i32
    %c0_i32_0 = arith.constant 0 : i32
    return %arg0, %c0_i32, %arg1 : i32, i32, i32
  }
  func.func @transform_1(%arg0: i32, %arg1: i32) -> (i32, i32) {
    %c0_i32 = arith.constant 0 : i32
    %c0_i32_0 = arith.constant 0 : i32
    %c0_i32_1 = arith.constant 0 : i32
    return %c0_i32, %c0_i32_0 : i32, i32
  }
  func.func @transform_2(%arg0: i32, %arg1: i32) -> (i32, i32) {
    %c0_i32 = arith.constant 0 : i32
    %c0_i32_0 = arith.constant 0 : i32
    %c0_i32_1 = arith.constant 0 : i32
    return %c0_i32, %c0_i32_0 : i32, i32
  }
  func.func @transform_3(%arg0: i32, %arg1: i32) -> (i32, i32) {
    %c0_i32 = arith.constant 0 : i32
    %c0_i32_0 = arith.constant 0 : i32
    %c0_i32_1 = arith.constant 0 : i32
    return %c0_i32, %c0_i32_0 : i32, i32
  }
  func.func @transform_4(%arg0: i32, %arg1: i32) -> (i32, i32) {
    %c0_i32 = arith.constant 0 : i32
    %c0_i32_0 = arith.constant 0 : i32
    %c0_i32_1 = arith.constant 0 : i32
    return %c0_i32, %c0_i32_0 : i32, i32
  }
  func.func @transform_5(%arg0: i32, %arg1: i32) -> (i32, i32, i32) {
    %c0_i32 = arith.constant 0 : i32
    %c0_i32_0 = arith.constant 0 : i32
    return %arg0, %c0_i32, %arg1 : i32, i32, i32
  }
}

</mosaic_0001>

<llo_original>
// kernel: tpu_custom_call.1
$region0: #{tpu_custom_call.1}
  #allocation0 [shape = 'u32[]', space=smem, size = 0x4, offset = 0x4, fixed_abs, tag = 'smem constant byte address 0x4 - core index']
  #allocation1 [shape = 'u32[144,128]{1,0:T(1,128)}', space=vmem, size = 0x12000, scoped, tag = 'internal scratch']
  %s0 = inlined_call_operand.hbm [shape: f32[2,16,256], index: 0, kind: input, shape index: {}]
  %s1 = inlined_call_operand.vmem [shape: f32[8,16], index: 1, kind: input, shape index: {}]
  %s2 = inlined_call_operand.vmem [shape: f32[8,1], index: 2, kind: input, shape index: {}]
  %s3 = inlined_call_operand.vmem [shape: f32[16,8], index: 3, kind: input, shape index: {}]
  %s4 = inlined_call_operand.vmem [shape: f32[16,1], index: 4, kind: input, shape index: {}]
  %s5 = inlined_call_operand.hbm [shape: f32[2,16,256], index: 5, kind: output, shape index: {}]
  %s6 = sld [smem:[#allocation0]]
  $region57: #{tpu_custom_call.1} parent=0
    _
  %s8 = ssub.s32 1, %s6
  %s9 = scalar_select 0, %s8, %s6
  $region1: #{tpu_custom_call.1} parent=0
    #allocation2 [shape = 'u8[16384]{0}', space=vmem, size = 0x4000, scoped, tag = 'input window, operand 0']
    #allocation3 [shape = 's32[2]{0}', space=sflag, size = 0x8, scoped, tag = 'scoped memory for tpu_custom_call.1']
    #allocation4 [shape = 's32[2]{0}', space=sflag, size = 0x8, scoped, tag = 'scoped memory for tpu_custom_call.1']
    #allocation5 [shape = 'u8[16384]{0}', space=vmem, size = 0x4000, scoped, tag = 'output window, operand 0']
    %10 = vsyncpa [#allocation3], 0
    %s11 = scalar_lea.sflag [#allocation3], 1
    %12 = vsyncpa %s11, 0
    %13 = vsyncpa [#allocation4], 0
    %s14 = scalar_lea.sflag [#allocation4], 1
    %15 = vsyncpa %s14, 0
    loop: start=0, step=1, limit=6
    $region2: #{tpu_custom_call.1} parent=1 // loop_pre_header
      _
    $region3: #{tpu_custom_call.1} parent=1 // loop_header
      %s17 = sphi 0, %s21
      %p18 = scmp.ge.s32.totalorder %s17, 6
      %s24 = sphi 0, %s36
      %s25 = sphi 0, %s32
      %s26 = sphi 0, %s24
      %s27 = sphi 0, %s25
      %s28 = sphi 0, %s26
      %s29 = sphi 0, %s27
      %s41 = sphi 0, %s43
      %s44 = sphi 0, %s41
      %s45 = sphi 0, %s44
      %s61 = sphi 0, %s45
      %s65 = sphi 0, %s65
      %s67 = sphi 0, %s65
      %s68 = sphi 0, %s67
      %s82 = sphi 0, %s68
      %s86 = sphi 0, %s86
      %s88 = sphi 0, %s86
      %s89 = sphi 0, %s88
      %s103 = sphi 0, %s89
      %s107 = sphi 0, %s107
      %s109 = sphi 0, %s107
      %s110 = sphi 0, %s109
      %s124 = sphi 0, %s110
      %s128 = sphi 0, %s128
      %s130 = sphi 0, %s128
      %s131 = sphi 0, %s130
      %s145 = sphi 0, %s131
      %s153 = sphi 0, %s155
      %s156 = sphi 0, %s153
      %s157 = sphi 0, %s156
      %s173 = sphi 0, %s157
    $region4: #{tpu_custom_call.1} parent=1 // loop_header_branch
      %20 = sbr.rel (%p18) target = $region8
    $region5: #{tpu_custom_call.1} parent=1 // loop_body
      %s22 = ssub.s32 %s17, 1
      %s23 = ssub.s32 %s17, 2
      %s30 = sadd.s32 1, %s25
      %p31 = scmp.ge.s32.totalorder %s30, 2
      %s32 = scalar_select %p31, 0, %s30
      %s33 = sadd.s32 1, %s24
      %s34 = scalar_select %p31, %s33, %s24
      %p35 = scmp.ge.s32.totalorder %s34, 2
      %s36 = scalar_select %p35, 0, %s34
      %s37 = ssub.s32 %s24, %s36
      %s38 = ssub.s32 %s25, %s32
      %s39 = sor.u32 %s37, %s38
      %p40 = scmp.eq.s32.totalorder %s39, 0
      %s42 = sadd.s32 %s41, 1
      %s43 = scalar_select %p40, %s41, %s42
      %p46 = pneg %p40
      %p47 = scmp.eq.s32.totalorder %s17, 3
      %p48 = por %p46, %p47
      %p49 = scmp.ne.s32.totalorder %s41, %s44
      %p50 = scmp.eq.s32.totalorder %s17, 0
      %p51 = por %p49, %p50
      %p52 = scmp.ne.s32.totalorder %s41, %s44
      %p53 = scmp.eq.s32.totalorder %s22, 3
      %p54 = por %p52, %p53
      %p55 = scmp.ne.s32.totalorder %s44, %s45
      %p56 = scmp.eq.s32.totalorder %s22, 0
      %p57 = por %p55, %p56
      %p58 = scmp.ne.s32.totalorder %s44, %s45
      %p59 = scmp.eq.s32.totalorder %s23, 3
      %p60 = por %p58, %p59
      %p62 = scmp.ne.s32.totalorder %s45, %s61
      %p63 = scmp.eq.s32.totalorder %s23, 0
      %p64 = por %p62, %p63
      %s66 = sadd.s32 %s65, 1
      %p69 = scmp.eq.s32.totalorder %s17, 3
      %p70 = scmp.ne.s32.totalorder %s65, %s67
      %p71 = scmp.eq.s32.totalorder %s17, 0
      %p72 = por %p70, %p71
      %p73 = scmp.ne.s32.totalorder %s65, %s67
      %p74 = scmp.eq.s32.totalorder %s22, 3
      %p75 = por %p73, %p74
      %p76 = scmp.ne.s32.totalorder %s67, %s68
      %p77 = scmp.eq.s32.totalorder %s22, 0
      %p78 = por %p76, %p77
      %p79 = scmp.ne.s32.totalorder %s67, %s68
      %p80 = scmp.eq.s32.totalorder %s23, 3
      %p81 = por %p79, %p80
      %p83 = scmp.ne.s32.totalorder %s68, %s82
      %p84 = scmp.eq.s32.totalorder %s23, 0
      %p85 = por %p83, %p84
      %s87 = sadd.s32 %s86, 1
      %p90 = scmp.eq.s32.totalorder %s17, 3
      %p91 = scmp.ne.s32.totalorder %s86, %s88
      %p92 = scmp.eq.s32.totalorder %s17, 0
      %p93 = por %p91, %p92
      %p94 = scmp.ne.s32.totalorder %s86, %s88
      %p95 = scmp.eq.s32.totalorder %s22, 3
      %p96 = por %p94, %p95
      %p97 = scmp.ne.s32.totalorder %s88, %s89
      %p98 = scmp.eq.s32.totalorder %s22, 0
      %p99 = por %p97, %p98
      %p100 = scmp.ne.s32.totalorder %s88, %s89
      %p101 = scmp.eq.s32.totalorder %s23, 3
      %p102 = por %p100, %p101
      %p104 = scmp.ne.s32.totalorder %s89, %s103
      %p105 = scmp.eq.s32.totalorder %s23, 0
      %p106 = por %p104, %p105
      %s108 = sadd.s32 %s107, 1
      %p111 = scmp.eq.s32.totalorder %s17, 3
      %p112 = scmp.ne.s32.totalorder %s107, %s109
      %p113 = scmp.eq.s32.totalorder %s17, 0
      %p114 = por %p112, %p113
      %p115 = scmp.ne.s32.totalorder %s107, %s109
      %p116 = scmp.eq.s32.totalorder %s22, 3
      %p117 = por %p115, %p116
      %p118 = scmp.ne.s32.totalorder %s109, %s110
      %p119 = scmp.eq.s32.totalorder %s22, 0
      %p120 = por %p118, %p119
      %p121 = scmp.ne.s32.totalorder %s109, %s110
      %p122 = scmp.eq.s32.totalorder %s23, 3
      %p123 = por %p121, %p122
      %p125 = scmp.ne.s32.totalorder %s110, %s124
      %p126 = scmp.eq.s32.totalorder %s23, 0
      %p127 = por %p125, %p126
      %s129 = sadd.s32 %s128, 1
      %p132 = scmp.eq.s32.totalorder %s17, 3
      %p133 = scmp.ne.s32.totalorder %s128, %s130
      %p134 = scmp.eq.s32.totalorder %s17, 0
      %p135 = por %p133, %p134
      %p136 = scmp.ne.s32.totalorder %s128, %s130
      %p137 = scmp.eq.s32.totalorder %s22, 3
      %p138 = por %p136, %p137
      %p139 = scmp.ne.s32.totalorder %s130, %s131
      %p140 = scmp.eq.s32.totalorder %s22, 0
      %p141 = por %p139, %p140
      %p142 = scmp.ne.s32.totalorder %s130, %s131
      %p143 = scmp.eq.s32.totalorder %s23, 3
      %p144 = por %p142, %p143
      %p146 = scmp.ne.s32.totalorder %s131, %s145
      %p147 = scmp.eq.s32.totalorder %s23, 0
      %p148 = por %p146, %p147
      %s149 = ssub.s32 %s24, %s36
      %s150 = ssub.s32 %s25, %s32
      %s151 = sor.u32 %s149, %s150
      %p152 = scmp.eq.s32.totalorder %s151, 0
      %s154 = sadd.s32 %s153, 1
      %s155 = scalar_select %p152, %s153, %s154
      %p158 = pneg %p152
      %p159 = scmp.eq.s32.totalorder %s17, 3
      %p160 = por %p158, %p159
      %p161 = scmp.ne.s32.totalorder %s153, %s156
      %p162 = scmp.eq.s32.totalorder %s17, 0
      %p163 = por %p161, %p162
      %p164 = scmp.ne.s32.totalorder %s153, %s156
      %p165 = scmp.eq.s32.totalorder %s22, 3
      %p166 = por %p164, %p165
      %p167 = scmp.ne.s32.totalorder %s156, %s157
      %p168 = scmp.eq.s32.totalorder %s22, 0
      %p169 = por %p167, %p168
      %p170 = scmp.ne.s32.totalorder %s156, %s157
      %p171 = scmp.eq.s32.totalorder %s23, 3
      %p172 = por %p170, %p171
      %p174 = scmp.ne.s32.totalorder %s157, %s173
      %p175 = scmp.eq.s32.totalorder %s23, 0
      %p176 = por %p174, %p175
      %p177 = scmp.le.s32.totalorder 1, %s17
      %p178 = scmp.lt.s32.totalorder %s17, 5
      %p179 = pnand %p177, %p178
      %p180 = pneg %p179
      // Predicated region
      $region9: #{tpu_custom_call.1} parent=5 // pred_check
        _
      $region10: #{tpu_custom_call.1} parent=5 // pred_check_branch
        %182 = sbr.rel (%p179) target = $region12
      $region11: #{tpu_custom_call.1} parent=5 // pred_region
        %s183 = ssub.s32 %s17, 1
        // Predicated region
        $region13: #{tpu_custom_call.1} parent=11 // pred_check
          %p184 = pneg %p78
        $region14: #{tpu_custom_call.1} parent=11 // pred_check_branch
          %186 = sbr.rel (%p184) target = $region16
        $region15: #{tpu_custom_call.1} parent=11 // pred_region
          _
        $region16: #{tpu_custom_call.1} parent=11 // pred_fallthru
          _
        // Predicated region
        $region17: #{tpu_custom_call.1} parent=11 // pred_check
          %p187 = pneg %p99
        $region18: #{tpu_custom_call.1} parent=11 // pred_check_branch
          %189 = sbr.rel (%p187) target = $region20
        $region19: #{tpu_custom_call.1} parent=11 // pred_region
          _
        $region20: #{tpu_custom_call.1} parent=11 // pred_fallthru
          _
        // Predicated region
        $region21: #{tpu_custom_call.1} parent=11 // pred_check
          %p190 = pneg %p120
        $region22: #{tpu_custom_call.1} parent=11 // pred_check_branch
          %192 = sbr.rel (%p190) target = $region24
        $region23: #{tpu_custom_call.1} parent=11 // pred_region
          _
        $region24: #{tpu_custom_call.1} parent=11 // pred_fallthru
          _
        // Predicated region
        $region25: #{tpu_custom_call.1} parent=11 // pred_check
          %p193 = pneg %p141
        $region26: #{tpu_custom_call.1} parent=11 // pred_check_branch
          %195 = sbr.rel (%p193) target = $region28
        $region27: #{tpu_custom_call.1} parent=11 // pred_region
          _
        $region28: #{tpu_custom_call.1} parent=11 // pred_fallthru
          _
      $region12: #{tpu_custom_call.1} parent=5 // pred_fallthru
        _
      %p196 = scmp.lt.s32.totalorder %s17, 4
      // Predicated region
      $region29: #{tpu_custom_call.1} parent=5 // pred_check
        %p197 = pneg %p196
      $region30: #{tpu_custom_call.1} parent=5 // pred_check_branch
        %199 = sbr.rel (%p197) target = $region32
      $region31: #{tpu_custom_call.1} parent=5 // pred_region
        // Predicated region
        $region33: #{tpu_custom_call.1} parent=31 // pred_check
          %p200 = pneg %p51
        $region34: #{tpu_custom_call.1} parent=31 // pred_check_branch
          %202 = sbr.rel (%p200) target = $region36
        $region35: #{tpu_custom_call.1} parent=31 // pred_region
          %s203 = sand.u32 %s41, 1
          %s204 = scalar_lea.sflag [#allocation3], %s203
          %s205 = sand.u32 %s41, 1
          %s206 = smul.addr %s205, 16
          %s207 = scalar_lea.vmem [#allocation2], %s206
          %s209 = ssub.s32 256, 256
          %210 = vsyncadd %s204, %s209
          %s211 = smul.addr %s24, 4
          %s212 = sadd.s32 %s25, %s211
          %s213 = smul.addr %s212, 128
          %s214 = scalar_lea.hbm %s0, %s213
          %s215 = sshll.u32 %s207, 4
          %s216 = int_to_ptr.vmem [resolvable:$true] %s215
          %221 = dma.hbm_to_vmem [thread:$0]  %s214, 256, %s216, %s204, 256, 128, 8
        $region36: #{tpu_custom_call.1} parent=31 // pred_fallthru
          _
      $region32: #{tpu_custom_call.1} parent=5 // pred_fallthru
        _
      %p222 = scmp.le.s32.totalorder 1, %s17
      %p223 = scmp.lt.s32.totalorder %s17, 5
      %p224 = pnand %p222, %p223
      %p225 = pneg %p224
      // Predicated region
      $region37: #{tpu_custom_call.1} parent=5 // pred_check
        _
      $region38: #{tpu_custom_call.1} parent=5 // pred_check_branch
        %227 = sbr.rel (%p224) target = $region40
      $region39: #{tpu_custom_call.1} parent=5 // pred_region
        %s228 = ssub.s32 %s17, 1
        %s229 = sand.u32 %s44, 1
        %s230 = scalar_lea.sflag [#allocation3], %s229
        %s231 = sand.u32 %s44, 1
        %s232 = smul.addr %s231, 16
        %s233 = scalar_lea.vmem [#allocation2], %s232
        // Predicated region
        $region41: #{tpu_custom_call.1} parent=39 // pred_check
          %p234 = pneg %p57
        $region42: #{tpu_custom_call.1} parent=39 // pred_check_branch
          %236 = sbr.rel (%p234) target = $region44
        $region43: #{tpu_custom_call.1} parent=39 // pred_region
          %237 = dma.done %s230, 256
        $region44: #{tpu_custom_call.1} parent=39 // pred_fallthru
          _
        %s238 = sand.u32 %s44, 1
        %s239 = scalar_lea.sflag [#allocation3], %s238
        %s240 = sand.u32 %s44, 1
        %s241 = smul.addr %s240, 16
        %s242 = scalar_lea.vmem [#allocation2], %s241
        %p243 = pneg %p57
        %p244 = pneg %p54
        %p245 = pneg %p78
        %p246 = pneg %p75
        %p247 = pneg %p99
        %p248 = pneg %p96
        %p249 = pneg %p120
        %p250 = pneg %p117
        %p251 = pneg %p141
        %p252 = pneg %p138
        %p253 = pneg %p169
        %p254 = pneg %p166
        %s255 = sand.u32 %s156, 1
        %s256 = scalar_lea.sflag [#allocation4], %s255
        %s257 = sand.u32 %s156, 1
        %s258 = smul.addr %s257, 16
        %s259 = scalar_lea.vmem [#allocation5], %s258
        %v260 = vld [vmem:[%s233] sm:$0xff]
        %v261 = vld [vmem:[%s233 + $0x8] sm:$0xff]
        %v262 = vld [vmem:[%s1] sm:$0xff]
        %v263 = vld [vmem:[%s2] sm:$0xff]
        %265 = vset.pattern.permute.xlu0 0
        %266 = vperm.xlu0 %265, %v263
        %v267 = vpop.permute.xlu0 %266
        %vm269 = vcmask 130048
        %v271 = vsel %vm269, %v262, 0
        %273 = vmatprep.subr.mxu0 0.0
        %v274 = vand.u32 %v260, 4294901760
        %275 = vmatpush1.msra.mxu0 %v274
        %276 = vmatprep.subr.mxu0 0.0
        %v277 = vand.u32 %v261, 4294901760
        %278 = vmatpush1.msra.mxu0 %v277
        %279 = vmatprep.subr.mxu0 0.0
        %280 = vmatpush1.msra.mxu0 0.0
        %281 = vmatprep.subr.mxu0 0.0
        %282 = vmatpush1.msra.mxu0 0.0
        %283 = vmatprep.subr.mxu0 0.0
        %284 = vmatpush1.msra.mxu0 0.0
        %285 = vmatprep.subr.mxu0 0.0
        %286 = vmatpush1.msra.mxu0 0.0
        %287 = vmatprep.subr.mxu0 0.0
        %288 = vmatpush1.msra.mxu0 0.0
        %289 = vmatprep.subr.mxu0 0.0
        %290 = vmatpush1.msra.mxu0 0.0
        %291 = vmatprep.subr.mxu0 0.0
        %292 = vmatpush1.msra.mxu0 0.0
        %293 = vmatprep.subr.mxu0 0.0
        %294 = vmatpush1.msra.mxu0 0.0
        %295 = vmatprep.subr.mxu0 0.0
        %296 = vmatpush1.msra.mxu0 0.0
        %297 = vmatprep.subr.mxu0 0.0
        %298 = vmatpush1.msra.mxu0 0.0
        %299 = vmatprep.subr.mxu0 0.0
        %300 = vmatpush1.msra.mxu0 0.0
        %301 = vmatprep.subr.mxu0 0.0
        %302 = vmatpush1.msra.mxu0 0.0
        %303 = vmatprep.subr.mxu0 0.0
        %304 = vmatpush1.msra.mxu0 0.0
        %305 = vmatprep.subr.mxu0 0.0
        %306 = vmatpush1.msra.mxu0 0.0
        %307 = vmatprep.subr.mxu0 0.0
        %308 = vmatpush1.msra.mxu0 0.0
        %309 = vmatprep.subr.mxu0 0.0
        %310 = vmatpush1.msra.mxu0 0.0
        %311 = vmatprep.subr.mxu0 0.0
        %312 = vmatpush1.msra.mxu0 0.0
        %313 = vmatprep.subr.mxu0 0.0
        %314 = vmatpush1.msra.mxu0 0.0
        %315 = vmatprep.subr.mxu0 0.0
        %316 = vmatpush1.msra.mxu0 0.0
        %317 = vmatprep.subr.mxu0 0.0
        %318 = vmatpush1.msra.mxu0 0.0
        %319 = vmatprep.subr.mxu0 0.0
        %320 = vmatpush1.msra.mxu0 0.0
        %321 = vmatprep.subr.mxu0 0.0
        %322 = vmatpush1.msra.mxu0 0.0
        %323 = vmatprep.subr.mxu0 0.0
        %324 = vmatpush1.msra.mxu0 0.0
        %325 = vmatprep.subr.mxu0 0.0
        %326 = vmatpush1.msra.mxu0 0.0
        %327 = vmatprep.subr.mxu0 0.0
        %328 = vmatpush1.msra.mxu0 0.0
        %329 = vmatprep.subr.mxu0 0.0
        %330 = vmatpush1.msra.mxu0 0.0
        %331 = vmatprep.subr.mxu0 0.0
        %332 = vmatpush1.msra.mxu0 0.0
        %333 = vmatprep.subr.mxu0 0.0
        %334 = vmatpush1.msra.mxu0 0.0
        %335 = vmatprep.subr.mxu0 0.0
        %336 = vmatpush1.msra.mxu0 0.0
        %337 = vmatprep.subr.mxu0 0.0
        %338 = vmatpush1.msra.mxu0 0.0
        %339 = vmatprep.mubr.f32.mxu0 0.0
        %v340 = vand.u32 %v271, 4294901760
        %v341 = vsub.f32 %v271, %v340
        %v342 = vand.u32 %v341, 4294901760
        %v343 = vsub.f32 %v341, %v342
        %v344 = vand.u32 %v343, 4294901760
        %345 = vmatmul.mubr.f32.gmra.mrb[0].mxu0 %v344
        %v346 = vpop.f32.mrb[0].mxu0
        %v347 = vadd.f32 %v267, %v346
        %v348 = vpop.f32.mrb[0].mxu0
        %349 = vdwg.mxu0
        %350 = vmatprep.subr.mxu0 0.0
        %v351 = vand.u32 %v260, 4294901760
        %v352 = vsub.f32 %v260, %v351
        %v353 = vand.u32 %v352, 4294901760
        %v354 = vsub.f32 %v352, %v353
        %v355 = vand.u32 %v354, 4294901760
        %356 = vmatpush1.msra.mxu0 %v355
        %357 = vmatprep.subr.mxu0 0.0
        %v358 = vand.u32 %v261, 4294901760
        %v359 = vsub.f32 %v261, %v358
        %v360 = vand.u32 %v359, 4294901760
        %v361 = vsub.f32 %v359, %v360
        %v362 = vand.u32 %v361, 4294901760
        %363 = vmatpush1.msra.mxu0 %v362
        %364 = vmatprep.subr.mxu0 0.0
        %365 = vmatpush1.msra.mxu0 0.0
        %366 = vmatprep.subr.mxu0 0.0
        %367 = vmatpush1.msra.mxu0 0.0
        %368 = vmatprep.subr.mxu0 0.0
        %369 = vmatpush1.msra.mxu0 0.0
        %370 = vmatprep.subr.mxu0 0.0
        %371 = vmatpush1.msra.mxu0 0.0
        %372 = vmatprep.subr.mxu0 0.0
        %373 = vmatpush1.msra.mxu0 0.0
        %374 = vmatprep.subr.mxu0 0.0
        %375 = vmatpush1.msra.mxu0 0.0
        %376 = vmatprep.subr.mxu0 0.0
        %377 = vmatpush1.msra.mxu0 0.0
        %378 = vmatprep.subr.mxu0 0.0
        %379 = vmatpush1.msra.mxu0 0.0
        %380 = vmatprep.subr.mxu0 0.0
        %381 = vmatpush1.msra.mxu0 0.0
        %382 = vmatprep.subr.mxu0 0.0
        %383 = vmatpush1.msra.mxu0 0.0
        %384 = vmatprep.subr.mxu0 0.0
        %385 = vmatpush1.msra.mxu0 0.0
        %386 = vmatprep.subr.mxu0 0.0
        %387 = vmatpush1.msra.mxu0 0.0
        %388 = vmatprep.subr.mxu0 0.0
        %389 = vmatpush1.msra.mxu0 0.0
        %390 = vmatprep.subr.mxu0 0.0
        %391 = vmatpush1.msra.mxu0 0.0
        %392 = vmatprep.subr.mxu0 0.0
        %393 = vmatpush1.msra.mxu0 0.0
        %394 = vmatprep.subr.mxu0 0.0
        %395 = vmatpush1.msra.mxu0 0.0
        %396 = vmatprep.subr.mxu0 0.0
        %397 = vmatpush1.msra.mxu0 0.0
        %398 = vmatprep.subr.mxu0 0.0
        %399 = vmatpush1.msra.mxu0 0.0
        %400 = vmatprep.subr.mxu0 0.0
        %401 = vmatpush1.msra.mxu0 0.0
        %402 = vmatprep.subr.mxu0 0.0
        %403 = vmatpush1.msra.mxu0 0.0
        %404 = vmatprep.subr.mxu0 0.0
        %405 = vmatpush1.msra.mxu0 0.0
        %406 = vmatprep.subr.mxu0 0.0
        %407 = vmatpush1.msra.mxu0 0.0
        %408 = vmatprep.subr.mxu0 0.0
        %409 = vmatpush1.msra.mxu0 0.0
        %410 = vmatprep.subr.mxu0 0.0
        %411 = vmatpush1.msra.mxu0 0.0
        %412 = vmatprep.subr.mxu0 0.0
        %413 = vmatpush1.msra.mxu0 0.0
        %414 = vmatprep.subr.mxu0 0.0
        %415 = vmatpush1.msra.mxu0 0.0
        %416 = vmatprep.subr.mxu0 0.0
        %417 = vmatpush1.msra.mxu0 0.0
        %418 = vmatprep.subr.mxu0 0.0
        %419 = vmatpush1.msra.mxu0 0.0
        %420 = vmatprep.subr.mxu0 0.0
        %421 = vmatpush1.msra.mxu0 0.0
        %422 = vmatprep.subr.mxu0 0.0
        %423 = vmatpush1.msra.mxu0 0.0
        %424 = vmatprep.mubr.f32.mxu0 0.0
        %v425 = vand.u32 %v271, 4294901760
        %426 = vmatmul.mubr.f32.gmra.mrb[0].mxu0 %v425
        %v427 = vpop.f32.mrb[0].mxu0
        %v428 = vadd.f32 %v347, %v427
        %v429 = vpop.f32.mrb[0].mxu0
        %430 = vdwg.mxu0
        %431 = vmatprep.subr.mxu0 0.0
        %v432 = vand.u32 %v260, 4294901760
        %v433 = vsub.f32 %v260, %v432
        %434 = vmatpush1.msra.mxu0 %v433
        %435 = vmatprep.subr.mxu0 0.0
        %v436 = vand.u32 %v261, 4294901760
        %v437 = vsub.f32 %v261, %v436
        %438 = vmatpush1.msra.mxu0 %v437
        %439 = vmatprep.subr.mxu0 0.0
        %440 = vmatpush1.msra.mxu0 0.0
        %441 = vmatprep.subr.mxu0 0.0
        %442 = vmatpush1.msra.mxu0 0.0
        %443 = vmatprep.subr.mxu0 0.0
        %444 = vmatpush1.msra.mxu0 0.0
        %445 = vmatprep.subr.mxu0 0.0
        %446 = vmatpush1.msra.mxu0 0.0
        %447 = vmatprep.subr.mxu0 0.0
        %448 = vmatpush1.msra.mxu0 0.0
        %449 = vmatprep.subr.mxu0 0.0
        %450 = vmatpush1.msra.mxu0 0.0
        %451 = vmatprep.subr.mxu0 0.0
        %452 = vmatpush1.msra.mxu0 0.0
        %453 = vmatprep.subr.mxu0 0.0
        %454 = vmatpush1.msra.mxu0 0.0
        %455 = vmatprep.subr.mxu0 0.0
        %456 = vmatpush1.msra.mxu0 0.0
        %457 = vmatprep.subr.mxu0 0.0
        %458 = vmatpush1.msra.mxu0 0.0
        %459 = vmatprep.subr.mxu0 0.0
        %460 = vmatpush1.msra.mxu0 0.0
        %461 = vmatprep.subr.mxu0 0.0
        %462 = vmatpush1.msra.mxu0 0.0
        %463 = vmatprep.subr.mxu0 0.0
        %464 = vmatpush1.msra.mxu0 0.0
        %465 = vmatprep.subr.mxu0 0.0
        %466 = vmatpush1.msra.mxu0 0.0
        %467 = vmatprep.subr.mxu0 0.0
        %468 = vmatpush1.msra.mxu0 0.0
        %469 = vmatprep.subr.mxu0 0.0
        %470 = vmatpush1.msra.mxu0 0.0
        %471 = vmatprep.subr.mxu0 0.0
        %472 = vmatpush1.msra.mxu0 0.0
        %473 = vmatprep.subr.mxu0 0.0
        %474 = vmatpush1.msra.mxu0 0.0
        %475 = vmatprep.subr.mxu0 0.0
        %476 = vmatpush1.msra.mxu0 0.0
        %477 = vmatprep.subr.mxu0 0.0
        %478 = vmatpush1.msra.mxu0 0.0
        %479 = vmatprep.subr.mxu0 0.0
        %480 = vmatpush1.msra.mxu0 0.0
        %481 = vmatprep.subr.mxu0 0.0
        %482 = vmatpush1.msra.mxu0 0.0
        %483 = vmatprep.subr.mxu0 0.0
        %484 = vmatpush1.msra.mxu0 0.0
        %485 = vmatprep.subr.mxu0 0.0
        %486 = vmatpush1.msra.mxu0 0.0
        %487 = vmatprep.subr.mxu0 0.0
        %488 = vmatpush1.msra.mxu0 0.0
        %489 = vmatprep.subr.mxu0 0.0
        %490 = vmatpush1.msra.mxu0 0.0
        %491 = vmatprep.subr.mxu0 0.0
        %492 = vmatpush1.msra.mxu0 0.0
        %493 = vmatprep.subr.mxu0 0.0
        %494 = vmatpush1.msra.mxu0 0.0
        %495 = vmatprep.subr.mxu0 0.0
        %496 = vmatpush1.msra.mxu0 0.0
        %497 = vmatprep.subr.mxu0 0.0
        %498 = vmatpush1.msra.mxu0 0.0
        %499 = vmatprep.mubr.f32.mxu0 0.0
        %v500 = vand.u32 %v271, 4294901760
        %v501 = vsub.f32 %v271, %v500
        %502 = vmatmul.mubr.f32.gmra.mrb[0].mxu0 %v501
        %v503 = vpop.f32.mrb[0].mxu0
        %v504 = vadd.f32 %v428, %v503
        %v505 = vpop.f32.mrb[0].mxu0
        %506 = vdwg.mxu0
        %507 = vmatprep.subr.mxu0 0.0
        %v508 = vand.u32 %v260, 4294901760
        %509 = vmatpush1.msra.mxu0 %v508
        %510 = vmatprep.subr.mxu0 0.0
        %v511 = vand.u32 %v261, 4294901760
        %512 = vmatpush1.msra.mxu0 %v511
        %513 = vmatprep.subr.mxu0 0.0
        %514 = vmatpush1.msra.mxu0 0.0
        %515 = vmatprep.subr.mxu0 0.0
        %516 = vmatpush1.msra.mxu0 0.0
        %517 = vmatprep.subr.mxu0 0.0
        %518 = vmatpush1.msra.mxu0 0.0
        %519 = vmatprep.subr.mxu0 0.0
        %520 = vmatpush1.msra.mxu0 0.0
        %521 = vmatprep.subr.mxu0 0.0
        %522 = vmatpush1.msra.mxu0 0.0
        %523 = vmatprep.subr.mxu0 0.0
        %524 = vmatpush1.msra.mxu0 0.0
        %525 = vmatprep.subr.mxu0 0.0
        %526 = vmatpush1.msra.mxu0 0.0
        %527 = vmatprep.subr.mxu0 0.0
        %528 = vmatpush1.msra.mxu0 0.0
        %529 = vmatprep.subr.mxu0 0.0
        %530 = vmatpush1.msra.mxu0 0.0
        %531 = vmatprep.subr.mxu0 0.0
        %532 = vmatpush1.msra.mxu0 0.0
        %533 = vmatprep.subr.mxu0 0.0
        %534 = vmatpush1.msra.mxu0 0.0
        %535 = vmatprep.subr.mxu0 0.0
        %536 = vmatpush1.msra.mxu0 0.0
        %537 = vmatprep.subr.mxu0 0.0
        %538 = vmatpush1.msra.mxu0 0.0
        %539 = vmatprep.subr.mxu0 0.0
        %540 = vmatpush1.msra.mxu0 0.0
        %541 = vmatprep.subr.mxu0 0.0
        %542 = vmatpush1.msra.mxu0 0.0
        %543 = vmatprep.subr.mxu0 0.0
        %544 = vmatpush1.msra.mxu0 0.0
        %545 = vmatprep.subr.mxu0 0.0
        %546 = vmatpush1.msra.mxu0 0.0
        %547 = vmatprep.subr.mxu0 0.0
        %548 = vmatpush1.msra.mxu0 0.0
        %549 = vmatprep.subr.mxu0 0.0
        %550 = vmatpush1.msra.mxu0 0.0
        %551 = vmatprep.subr.mxu0 0.0
        %552 = vmatpush1.msra.mxu0 0.0
        %553 = vmatprep.subr.mxu0 0.0
        %554 = vmatpush1.msra.mxu0 0.0
        %555 = vmatprep.subr.mxu0 0.0
        %556 = vmatpush1.msra.mxu0 0.0
        %557 = vmatprep.subr.mxu0 0.0
        %558 = vmatpush1.msra.mxu0 0.0
        %559 = vmatprep.subr.mxu0 0.0
        %560 = vmatpush1.msra.mxu0 0.0
        %561 = vmatprep.subr.mxu0 0.0
        %562 = vmatpush1.msra.mxu0 0.0
        %563 = vmatprep.subr.mxu0 0.0
        %564 = vmatpush1.msra.mxu0 0.0
        %565 = vmatprep.subr.mxu0 0.0
        %566 = vmatpush1.msra.mxu0 0.0
        %567 = vmatprep.subr.mxu0 0.0
        %568 = vmatpush1.msra.mxu0 0.0
        %569 = vmatprep.subr.mxu0 0.0
        %570 = vmatpush1.msra.mxu0 0.0
        %571 = vmatprep.subr.mxu0 0.0
        %572 = vmatpush1.msra.mxu0 0.0
        %573 = vmatprep.mubr.f32.mxu0 0.0
        %v574 = vand.u32 %v271, 4294901760
        %v575 = vsub.f32 %v271, %v574
        %v576 = vand.u32 %v575, 4294901760
        %577 = vmatmul.mubr.f32.gmra.mrb[0].mxu0 %v576
        %v578 = vpop.f32.mrb[0].mxu0
        %v579 = vadd.f32 %v504, %v578
        %v580 = vpop.f32.mrb[0].mxu0
        %581 = vdwg.mxu0
        %582 = vmatprep.subr.mxu0 0.0
        %v583 = vand.u32 %v260, 4294901760
        %v584 = vsub.f32 %v260, %v583
        %v585 = vand.u32 %v584, 4294901760
        %586 = vmatpush1.msra.mxu0 %v585
        %587 = vmatprep.subr.mxu0 0.0
        %v588 = vand.u32 %v261, 4294901760
        %v589 = vsub.f32 %v261, %v588
        %v590 = vand.u32 %v589, 4294901760
        %591 = vmatpush1.msra.mxu0 %v590
        %592 = vmatprep.subr.mxu0 0.0
        %593 = vmatpush1.msra.mxu0 0.0
        %594 = vmatprep.subr.mxu0 0.0
        %595 = vmatpush1.msra.mxu0 0.0
        %596 = vmatprep.subr.mxu0 0.0
        %597 = vmatpush1.msra.mxu0 0.0
        %598 = vmatprep.subr.mxu0 0.0
        %599 = vmatpush1.msra.mxu0 0.0
        %600 = vmatprep.subr.mxu0 0.0
        %601 = vmatpush1.msra.mxu0 0.0
        %602 = vmatprep.subr.mxu0 0.0
        %603 = vmatpush1.msra.mxu0 0.0
        %604 = vmatprep.subr.mxu0 0.0
        %605 = vmatpush1.msra.mxu0 0.0
        %606 = vmatprep.subr.mxu0 0.0
        %607 = vmatpush1.msra.mxu0 0.0
        %608 = vmatprep.subr.mxu0 0.0
        %609 = vmatpush1.msra.mxu0 0.0
        %610 = vmatprep.subr.mxu0 0.0
        %611 = vmatpush1.msra.mxu0 0.0
        %612 = vmatprep.subr.mxu0 0.0
        %613 = vmatpush1.msra.mxu0 0.0
        %614 = vmatprep.subr.mxu0 0.0
        %615 = vmatpush1.msra.mxu0 0.0
        %616 = vmatprep.subr.mxu0 0.0
        %617 = vmatpush1.msra.mxu0 0.0
        %618 = vmatprep.subr.mxu0 0.0
        %619 = vmatpush1.msra.mxu0 0.0
        %620 = vmatprep.subr.mxu0 0.0
        %621 = vmatpush1.msra.mxu0 0.0
        %622 = vmatprep.subr.mxu0 0.0
        %623 = vmatpush1.msra.mxu0 0.0
        %624 = vmatprep.subr.mxu0 0.0
        %625 = vmatpush1.msra.mxu0 0.0
        %626 = vmatprep.subr.mxu0 0.0
        %627 = vmatpush1.msra.mxu0 0.0
        %628 = vmatprep.subr.mxu0 0.0
        %629 = vmatpush1.msra.mxu0 0.0
        %630 = vmatprep.subr.mxu0 0.0
        %631 = vmatpush1.msra.mxu0 0.0
        %632 = vmatprep.subr.mxu0 0.0
        %633 = vmatpush1.msra.mxu0 0.0
        %634 = vmatprep.subr.mxu0 0.0
        %635 = vmatpush1.msra.mxu0 0.0
        %636 = vmatprep.subr.mxu0 0.0
        %637 = vmatpush1.msra.mxu0 0.0
        %638 = vmatprep.subr.mxu0 0.0
        %639 = vmatpush1.msra.mxu0 0.0
        %640 = vmatprep.subr.mxu0 0.0
        %641 = vmatpush1.msra.mxu0 0.0
        %642 = vmatprep.subr.mxu0 0.0
        %643 = vmatpush1.msra.mxu0 0.0
        %644 = vmatprep.subr.mxu0 0.0
        %645 = vmatpush1.msra.mxu0 0.0
        %646 = vmatprep.subr.mxu0 0.0
        %647 = vmatpush1.msra.mxu0 0.0
        %648 = vmatprep.subr.mxu0 0.0
        %649 = vmatpush1.msra.mxu0 0.0
        %650 = vmatprep.subr.mxu0 0.0
        %651 = vmatpush1.msra.mxu0 0.0
        %652 = vmatprep.mubr.f32.mxu0 0.0
        %v653 = vand.u32 %v271, 4294901760
        %654 = vmatmul.mubr.f32.gmra.mrb[0].mxu0 %v653
        %v655 = vpop.f32.mrb[0].mxu0
        %v656 = vadd.f32 %v579, %v655
        %v657 = vpop.f32.mrb[0].mxu0
        %658 = vdwg.mxu0
        %659 = vmatprep.subr.mxu0 0.0
        %v660 = vand.u32 %v260, 4294901760
        %661 = vmatpush1.msra.mxu0 %v660
        %662 = vmatprep.subr.mxu0 0.0
        %v663 = vand.u32 %v261, 4294901760
        %664 = vmatpush1.msra.mxu0 %v663
        %665 = vmatprep.subr.mxu0 0.0
        %666 = vmatpush1.msra.mxu0 0.0
        %667 = vmatprep.subr.mxu0 0.0
        %668 = vmatpush1.msra.mxu0 0.0
        %669 = vmatprep.subr.mxu0 0.0
        %670 = vmatpush1.msra.mxu0 0.0
        %671 = vmatprep.subr.mxu0 0.0
        %672 = vmatpush1.msra.mxu0 0.0
        %673 = vmatprep.subr.mxu0 0.0
        %674 = vmatpush1.msra.mxu0 0.0
        %675 = vmatprep.subr.mxu0 0.0
        %676 = vmatpush1.msra.mxu0 0.0
        %677 = vmatprep.subr.mxu0 0.0
        %678 = vmatpush1.msra.mxu0 0.0
        %679 = vmatprep.subr.mxu0 0.0
        %680 = vmatpush1.msra.mxu0 0.0
        %681 = vmatprep.subr.mxu0 0.0
        %682 = vmatpush1.msra.mxu0 0.0
        %683 = vmatprep.subr.mxu0 0.0
        %684 = vmatpush1.msra.mxu0 0.0
        %685 = vmatprep.subr.mxu0 0.0
        %686 = vmatpush1.msra.mxu0 0.0
        %687 = vmatprep.subr.mxu0 0.0
        %688 = vmatpush1.msra.mxu0 0.0
        %689 = vmatprep.subr.mxu0 0.0
        %690 = vmatpush1.msra.mxu0 0.0
        %691 = vmatprep.subr.mxu0 0.0
        %692 = vmatpush1.msra.mxu0 0.0
        %693 = vmatprep.subr.mxu0 0.0
        %694 = vmatpush1.msra.mxu0 0.0
        %695 = vmatprep.subr.mxu0 0.0
        %696 = vmatpush1.msra.mxu0 0.0
        %697 = vmatprep.subr.mxu0 0.0
        %698 = vmatpush1.msra.mxu0 0.0
        %699 = vmatprep.subr.mxu0 0.0
        %700 = vmatpush1.msra.mxu0 0.0
        %701 = vmatprep.subr.mxu0 0.0
        %702 = vmatpush1.msra.mxu0 0.0
        %703 = vmatprep.subr.mxu0 0.0
        %704 = vmatpush1.msra.mxu0 0.0
        %705 = vmatprep.subr.mxu0 0.0
        %706 = vmatpush1.msra.mxu0 0.0
        %707 = vmatprep.subr.mxu0 0.0
        %708 = vmatpush1.msra.mxu0 0.0
        %709 = vmatprep.subr.mxu0 0.0
        %710 = vmatpush1.msra.mxu0 0.0
        %711 = vmatprep.subr.mxu0 0.0
        %712 = vmatpush1.msra.mxu0 0.0
        %713 = vmatprep.subr.mxu0 0.0
        %714 = vmatpush1.msra.mxu0 0.0
        %715 = vmatprep.subr.mxu0 0.0
        %716 = vmatpush1.msra.mxu0 0.0
        %717 = vmatprep.subr.mxu0 0.0
        %718 = vmatpush1.msra.mxu0 0.0
        %719 = vmatprep.subr.mxu0 0.0
        %720 = vmatpush1.msra.mxu0 0.0
        %721 = vmatprep.subr.mxu0 0.0
        %722 = vmatpush1.msra.mxu0 0.0
        %723 = vmatprep.subr.mxu0 0.0
        %724 = vmatpush1.msra.mxu0 0.0
        %725 = vmatprep.mubr.f32.mxu0 0.0
        %v726 = vand.u32 %v271, 4294901760
        %727 = vmatmul.mubr.f32.gmra.mrb[0].mxu0 %v726
        %v728 = vpop.f32.mrb[0].mxu0
        %v729 = vadd.f32 %v656, %v728
        %v730 = vpop.f32.mrb[0].mxu0
        %731 = vdwg.mxu0
        %v732 = vxor.u32 %v729, 2147483648
        %v733 = vmul.f32 %v732, 1.442695
        %v734 = vpow.pop %v733
        %v735 = vadd.f32 %v734, 1.0
        %v736 = vrcp.pop %v735
        %v737 = vmul.f32 1.0, %v736
        %v738 = vmul.f32 %v729, %v737
        %v739 = vld [vmem:[%s3] sm:$0xff]
        %v740 = vld [vmem:[%s3 + $0x8] sm:$0xff]
        %v741 = vld [vmem:[%s4] sm:$0xff]
        %v742 = vld [vmem:[%s4 + $0x8] sm:$0xff]
        %744 = vset.pattern.permute.xlu0 0
        %745 = vperm.xlu0 %744, %v741
        %v746 = vpop.permute.xlu0 %745
        %749 = vset.pattern.permute.xlu0 0
        %750 = vperm.xlu0 %749, %v742
        %v751 = vpop.permute.xlu0 %750
        %vm753 = vcmask 64512
        %v755 = vsel %vm753, %v739, 0
        %v758 = vsel %vm753, %v740, 0
        %760 = vmatprep.subr.mxu0 0.0
        %v761 = vand.u32 %v738, 4294901760
        %762 = vmatpush1.msra.mxu0 %v761
        %763 = vmatprep.subr.mxu0 0.0
        %764 = vmatpush1.msra.mxu0 0.0
        %765 = vmatprep.subr.mxu0 0.0
        %766 = vmatpush1.msra.mxu0 0.0
        %767 = vmatprep.subr.mxu0 0.0
        %768 = vmatpush1.msra.mxu0 0.0
        %769 = vmatprep.subr.mxu0 0.0
        %770 = vmatpush1.msra.mxu0 0.0
        %771 = vmatprep.subr.mxu0 0.0
        %772 = vmatpush1.msra.mxu0 0.0
        %773 = vmatprep.subr.mxu0 0.0
        %774 = vmatpush1.msra.mxu0 0.0
        %775 = vmatprep.subr.mxu0 0.0
        %776 = vmatpush1.msra.mxu0 0.0
        %777 = vmatprep.subr.mxu0 0.0
        %778 = vmatpush1.msra.mxu0 0.0
        %779 = vmatprep.subr.mxu0 0.0
        %780 = vmatpush1.msra.mxu0 0.0
        %781 = vmatprep.subr.mxu0 0.0
        %782 = vmatpush1.msra.mxu0 0.0
        %783 = vmatprep.subr.mxu0 0.0
        %784 = vmatpush1.msra.mxu0 0.0
        %785 = vmatprep.subr.mxu0 0.0
        %786 = vmatpush1.msra.mxu0 0.0
        %787 = vmatprep.subr.mxu0 0.0
        %788 = vmatpush1.msra.mxu0 0.0
        %789 = vmatprep.subr.mxu0 0.0
        %790 = vmatpush1.msra.mxu0 0.0
        %791 = vmatprep.subr.mxu0 0.0
        %792 = vmatpush1.msra.mxu0 0.0
        %793 = vmatprep.subr.mxu0 0.0
        %794 = vmatpush1.msra.mxu0 0.0
        %795 = vmatprep.subr.mxu0 0.0
        %796 = vmatpush1.msra.mxu0 0.0
        %797 = vmatprep.subr.mxu0 0.0
        %798 = vmatpush1.msra.mxu0 0.0
        %799 = vmatprep.subr.mxu0 0.0
        %800 = vmatpush1.msra.mxu0 0.0
        %801 = vmatprep.subr.mxu0 0.0
        %802 = vmatpush1.msra.mxu0 0.0
        %803 = vmatprep.subr.mxu0 0.0
        %804 = vmatpush1.msra.mxu0 0.0
        %805 = vmatprep.subr.mxu0 0.0
        %806 = vmatpush1.msra.mxu0 0.0
        %807 = vmatprep.subr.mxu0 0.0
        %808 = vmatpush1.msra.mxu0 0.0
        %809 = vmatprep.subr.mxu0 0.0
        %810 = vmatpush1.msra.mxu0 0.0
        %811 = vmatprep.subr.mxu0 0.0
        %812 = vmatpush1.msra.mxu0 0.0
        %813 = vmatprep.subr.mxu0 0.0
        %814 = vmatpush1.msra.mxu0 0.0
        %815 = vmatprep.subr.mxu0 0.0
        %816 = vmatpush1.msra.mxu0 0.0
        %817 = vmatprep.subr.mxu0 0.0
        %818 = vmatpush1.msra.mxu0 0.0
        %819 = vmatprep.subr.mxu0 0.0
        %820 = vmatpush1.msra.mxu0 0.0
        %821 = vmatprep.subr.mxu0 0.0
        %822 = vmatpush1.msra.mxu0 0.0
        %823 = vmatprep.subr.mxu0 0.0
        %824 = vmatpush1.msra.mxu0 0.0
        %825 = vmatprep.mubr.f32.mxu0 0.0
        %v826 = vand.u32 %v755, 4294901760
        %v827 = vsub.f32 %v755, %v826
        %v828 = vand.u32 %v827, 4294901760
        %v829 = vsub.f32 %v827, %v828
        %v830 = vand.u32 %v829, 4294901760
        %831 = vmatmul.mubr.f32.gmra.mrb[0].mxu0 %v830
        %v832 = vpop.f32.mrb[0].mxu0
        %v833 = vadd.f32 %v746, %v832
        %v834 = vpop.f32.mrb[0].mxu0
        %835 = vmatprep.mubr.f32.mxu0 0.0
        %v836 = vand.u32 %v758, 4294901760
        %v837 = vsub.f32 %v758, %v836
        %v838 = vand.u32 %v837, 4294901760
        %v839 = vsub.f32 %v837, %v838
        %v840 = vand.u32 %v839, 4294901760
        %841 = vmatmul.mubr.f32.gmra.mrb[0].mxu0 %v840
        %v842 = vpop.f32.mrb[0].mxu0
        %v843 = vadd.f32 %v751, %v842
        %v844 = vpop.f32.mrb[0].mxu0
        %845 = vdwg.mxu0
        %846 = vmatprep.subr.mxu0 0.0
        %v847 = vand.u32 %v738, 4294901760
        %v848 = vsub.f32 %v738, %v847
        %v849 = vand.u32 %v848, 4294901760
        %v850 = vsub.f32 %v848, %v849
        %v851 = vand.u32 %v850, 4294901760
        %852 = vmatpush1.msra.mxu0 %v851
        %853 = vmatprep.subr.mxu0 0.0
        %854 = vmatpush1.msra.mxu0 0.0
        %855 = vmatprep.subr.mxu0 0.0
        %856 = vmatpush1.msra.mxu0 0.0
        %857 = vmatprep.subr.mxu0 0.0
        %858 = vmatpush1.msra.mxu0 0.0
        %859 = vmatprep.subr.mxu0 0.0
        %860 = vmatpush1.msra.mxu0 0.0
        %861 = vmatprep.subr.mxu0 0.0
        %862 = vmatpush1.msra.mxu0 0.0
        %863 = vmatprep.subr.mxu0 0.0
        %864 = vmatpush1.msra.mxu0 0.0
        %865 = vmatprep.subr.mxu0 0.0
        %866 = vmatpush1.msra.mxu0 0.0
        %867 = vmatprep.subr.mxu0 0.0
        %868 = vmatpush1.msra.mxu0 0.0
        %869 = vmatprep.subr.mxu0 0.0
        %870 = vmatpush1.msra.mxu0 0.0
        %871 = vmatprep.subr.mxu0 0.0
        %872 = vmatpush1.msra.mxu0 0.0
        %873 = vmatprep.subr.mxu0 0.0
        %874 = vmatpush1.msra.mxu0 0.0
        %875 = vmatprep.subr.mxu0 0.0
        %876 = vmatpush1.msra.mxu0 0.0
        %877 = vmatprep.subr.mxu0 0.0
        %878 = vmatpush1.msra.mxu0 0.0
        %879 = vmatprep.subr.mxu0 0.0
        %880 = vmatpush1.msra.mxu0 0.0
        %881 = vmatprep.subr.mxu0 0.0
        %882 = vmatpush1.msra.mxu0 0.0
        %883 = vmatprep.subr.mxu0 0.0
        %884 = vmatpush1.msra.mxu0 0.0
        %885 = vmatprep.subr.mxu0 0.0
        %886 = vmatpush1.msra.mxu0 0.0
        %887 = vmatprep.subr.mxu0 0.0
        %888 = vmatpush1.msra.mxu0 0.0
        %889 = vmatprep.subr.mxu0 0.0
        %890 = vmatpush1.msra.mxu0 0.0
        %891 = vmatprep.subr.mxu0 0.0
        %892 = vmatpush1.msra.mxu0 0.0
        %893 = vmatprep.subr.mxu0 0.0
        %894 = vmatpush1.msra.mxu0 0.0
        %895 = vmatprep.subr.mxu0 0.0
        %896 = vmatpush1.msra.mxu0 0.0
        %897 = vmatprep.subr.mxu0 0.0
        %898 = vmatpush1.msra.mxu0 0.0
        %899 = vmatprep.subr.mxu0 0.0
        %900 = vmatpush1.msra.mxu0 0.0
        %901 = vmatprep.subr.mxu0 0.0
        %902 = vmatpush1.msra.mxu0 0.0
        %903 = vmatprep.subr.mxu0 0.0
        %904 = vmatpush1.msra.mxu0 0.0
        %905 = vmatprep.subr.mxu0 0.0
        %906 = vmatpush1.msra.mxu0 0.0
        %907 = vmatprep.subr.mxu0 0.0
        %908 = vmatpush1.msra.mxu0 0.0
        %909 = vmatprep.subr.mxu0 0.0
        %910 = vmatpush1.msra.mxu0 0.0
        %911 = vmatprep.subr.mxu0 0.0
        %912 = vmatpush1.msra.mxu0 0.0
        %913 = vmatprep.subr.mxu0 0.0
        %914 = vmatpush1.msra.mxu0 0.0
        %915 = vmatprep.mubr.f32.mxu0 0.0
        %v916 = vand.u32 %v755, 4294901760
        %917 = vmatmul.mubr.f32.gmra.mrb[0].mxu0 %v916
        %v918 = vpop.f32.mrb[0].mxu0
        %v919 = vadd.f32 %v833, %v918
        %v920 = vpop.f32.mrb[0].mxu0
        %921 = vmatprep.mubr.f32.mxu0 0.0
        %v922 = vand.u32 %v758, 4294901760
        %923 = vmatmul.mubr.f32.gmra.mrb[0].mxu0 %v922
        %v924 = vpop.f32.mrb[0].mxu0
        %v925 = vadd.f32 %v843, %v924
        %v926 = vpop.f32.mrb[0].mxu0
        %927 = vdwg.mxu0
        %928 = vmatprep.subr.mxu0 0.0
        %v929 = vand.u32 %v738, 4294901760
        %v930 = vsub.f32 %v738, %v929
        %931 = vmatpush1.msra.mxu0 %v930
        %932 = vmatprep.subr.mxu0 0.0
        %933 = vmatpush1.msra.mxu0 0.0
        %934 = vmatprep.subr.mxu0 0.0
        %935 = vmatpush1.msra.mxu0 0.0
        %936 = vmatprep.subr.mxu0 0.0
        %937 = vmatpush1.msra.mxu0 0.0
        %938 = vmatprep.subr.mxu0 0.0
        %939 = vmatpush1.msra.mxu0 0.0
        %940 = vmatprep.subr.mxu0 0.0
        %941 = vmatpush1.msra.mxu0 0.0
        %942 = vmatprep.subr.mxu0 0.0
        %943 = vmatpush1.msra.mxu0 0.0
        %944 = vmatprep.subr.mxu0 0.0
        %945 = vmatpush1.msra.mxu0 0.0
        %946 = vmatprep.subr.mxu0 0.0
        %947 = vmatpush1.msra.mxu0 0.0
        %948 = vmatprep.subr.mxu0 0.0
        %949 = vmatpush1.msra.mxu0 0.0
        %950 = vmatprep.subr.mxu0 0.0
        %951 = vmatpush1.msra.mxu0 0.0
        %952 = vmatprep.subr.mxu0 0.0
        %953 = vmatpush1.msra.mxu0 0.0
        %954 = vmatprep.subr.mxu0 0.0
        %955 = vmatpush1.msra.mxu0 0.0
        %956 = vmatprep.subr.mxu0 0.0
        %957 = vmatpush1.msra.mxu0 0.0
        %958 = vmatprep.subr.mxu0 0.0
        %959 = vmatpush1.msra.mxu0 0.0
        %960 = vmatprep.subr.mxu0 0.0
        %961 = vmatpush1.msra.mxu0 0.0
        %962 = vmatprep.subr.mxu0 0.0
        %963 = vmatpush1.msra.mxu0 0.0
        %964 = vmatprep.subr.mxu0 0.0
        %965 = vmatpush1.msra.mxu0 0.0
        %966 = vmatprep.subr.mxu0 0.0
        %967 = vmatpush1.msra.mxu0 0.0
        %968 = vmatprep.subr.mxu0 0.0
        %969 = vmatpush1.msra.mxu0 0.0
        %970 = vmatprep.subr.mxu0 0.0
        %971 = vmatpush1.msra.mxu0 0.0
        %972 = vmatprep.subr.mxu0 0.0
        %973 = vmatpush1.msra.mxu0 0.0
        %974 = vmatprep.subr.mxu0 0.0
        %975 = vmatpush1.msra.mxu0 0.0
        %976 = vmatprep.subr.mxu0 0.0
        %977 = vmatpush1.msra.mxu0 0.0
        %978 = vmatprep.subr.mxu0 0.0
        %979 = vmatpush1.msra.mxu0 0.0
        %980 = vmatprep.subr.mxu0 0.0
        %981 = vmatpush1.msra.mxu0 0.0
        %982 = vmatprep.subr.mxu0 0.0
        %983 = vmatpush1.msra.mxu0 0.0
        %984 = vmatprep.subr.mxu0 0.0
        %985 = vmatpush1.msra.mxu0 0.0
        %986 = vmatprep.subr.mxu0 0.0
        %987 = vmatpush1.msra.mxu0 0.0
        %988 = vmatprep.subr.mxu0 0.0
        %989 = vmatpush1.msra.mxu0 0.0
        %990 = vmatprep.subr.mxu0 0.0
        %991 = vmatpush1.msra.mxu0 0.0
        %992 = vmatprep.subr.mxu0 0.0
        %993 = vmatpush1.msra.mxu0 0.0
        %994 = vmatprep.mubr.f32.mxu0 0.0
        %v995 = vand.u32 %v755, 4294901760
        %v996 = vsub.f32 %v755, %v995
        %997 = vmatmul.mubr.f32.gmra.mrb[0].mxu0 %v996
        %v998 = vpop.f32.mrb[0].mxu0
        %v999 = vadd.f32 %v919, %v998
        %v1000 = vpop.f32.mrb[0].mxu0
        %1001 = vmatprep.mubr.f32.mxu0 0.0
        %v1002 = vand.u32 %v758, 4294901760
        %v1003 = vsub.f32 %v758, %v1002
        %1004 = vmatmul.mubr.f32.gmra.mrb[0].mxu0 %v1003
        %v1005 = vpop.f32.mrb[0].mxu0
        %v1006 = vadd.f32 %v925, %v1005
        %v1007 = vpop.f32.mrb[0].mxu0
        %1008 = vdwg.mxu0
        %1009 = vmatprep.subr.mxu0 0.0
        %v1010 = vand.u32 %v738, 4294901760
        %1011 = vmatpush1.msra.mxu0 %v1010
        %1012 = vmatprep.subr.mxu0 0.0
        %1013 = vmatpush1.msra.mxu0 0.0
        %1014 = vmatprep.subr.mxu0 0.0
        %1015 = vmatpush1.msra.mxu0 0.0
        %1016 = vmatprep.subr.mxu0 0.0
        %1017 = vmatpush1.msra.mxu0 0.0
        %1018 = vmatprep.subr.mxu0 0.0
        %1019 = vmatpush1.msra.mxu0 0.0
        %1020 = vmatprep.subr.mxu0 0.0
        %1021 = vmatpush1.msra.mxu0 0.0
        %1022 = vmatprep.subr.mxu0 0.0
        %1023 = vmatpush1.msra.mxu0 0.0
        %1024 = vmatprep.subr.mxu0 0.0
        %1025 = vmatpush1.msra.mxu0 0.0
        %1026 = vmatprep.subr.mxu0 0.0
        %1027 = vmatpush1.msra.mxu0 0.0
        %1028 = vmatprep.subr.mxu0 0.0
        %1029 = vmatpush1.msra.mxu0 0.0
        %1030 = vmatprep.subr.mxu0 0.0
        %1031 = vmatpush1.msra.mxu0 0.0
        %1032 = vmatprep.subr.mxu0 0.0
        %1033 = vmatpush1.msra.mxu0 0.0
        %1034 = vmatprep.subr.mxu0 0.0
        %1035 = vmatpush1.msra.mxu0 0.0
        %1036 = vmatprep.subr.mxu0 0.0
        %1037 = vmatpush1.msra.mxu0 0.0
        %1038 = vmatprep.subr.mxu0 0.0
        %1039 = vmatpush1.msra.mxu0 0.0
        %1040 = vmatprep.subr.mxu0 0.0
        %1041 = vmatpush1.msra.mxu0 0.0
        %1042 = vmatprep.subr.mxu0 0.0
        %1043 = vmatpush1.msra.mxu0 0.0
        %1044 = vmatprep.subr.mxu0 0.0
        %1045 = vmatpush1.msra.mxu0 0.0
        %1046 = vmatprep.subr.mxu0 0.0
        %1047 = vmatpush1.msra.mxu0 0.0
        %1048 = vmatprep.subr.mxu0 0.0
        %1049 = vmatpush1.msra.mxu0 0.0
        %1050 = vmatprep.subr.mxu0 0.0
        %1051 = vmatpush1.msra.mxu0 0.0
        %1052 = vmatprep.subr.mxu0 0.0
        %1053 = vmatpush1.msra.mxu0 0.0
        %1054 = vmatprep.subr.mxu0 0.0
        %1055 = vmatpush1.msra.mxu0 0.0
        %1056 = vmatprep.subr.mxu0 0.0
        %1057 = vmatpush1.msra.mxu0 0.0
        %1058 = vmatprep.subr.mxu0 0.0
        %1059 = vmatpush1.msra.mxu0 0.0
        %1060 = vmatprep.subr.mxu0 0.0
        %1061 = vmatpush1.msra.mxu0 0.0
        %1062 = vmatprep.subr.mxu0 0.0
        %1063 = vmatpush1.msra.mxu0 0.0
        %1064 = vmatprep.subr.mxu0 0.0
        %1065 = vmatpush1.msra.mxu0 0.0
        %1066 = vmatprep.subr.mxu0 0.0
        %1067 = vmatpush1.msra.mxu0 0.0
        %1068 = vmatprep.subr.mxu0 0.0
        %1069 = vmatpush1.msra.mxu0 0.0
        %1070 = vmatprep.subr.mxu0 0.0
        %1071 = vmatpush1.msra.mxu0 0.0
        %1072 = vmatprep.subr.mxu0 0.0
        %1073 = vmatpush1.msra.mxu0 0.0
        %1074 = vmatprep.mubr.f32.mxu0 0.0
        %v1075 = vand.u32 %v755, 4294901760
        %v1076 = vsub.f32 %v755, %v1075
        %v1077 = vand.u32 %v1076, 4294901760
        %1078 = vmatmul.mubr.f32.gmra.mrb[0].mxu0 %v1077
        %v1079 = vpop.f32.mrb[0].mxu0
        %v1080 = vadd.f32 %v999, %v1079
        %v1081 = vpop.f32.mrb[0].mxu0
        %1082 = vmatprep.mubr.f32.mxu0 0.0
        %v1083 = vand.u32 %v758, 4294901760
        %v1084 = vsub.f32 %v758, %v1083
        %v1085 = vand.u32 %v1084, 4294901760
        %1086 = vmatmul.mubr.f32.gmra.mrb[0].mxu0 %v1085
        %v1087 = vpop.f32.mrb[0].mxu0
        %v1088 = vadd.f32 %v1006, %v1087
        %v1089 = vpop.f32.mrb[0].mxu0
        %1090 = vdwg.mxu0
        %1091 = vmatprep.subr.mxu0 0.0
        %v1092 = vand.u32 %v738, 4294901760
        %v1093 = vsub.f32 %v738, %v1092
        %v1094 = vand.u32 %v1093, 4294901760
        %1095 = vmatpush1.msra.mxu0 %v1094
        %1096 = vmatprep.subr.mxu0 0.0
        %1097 = vmatpush1.msra.mxu0 0.0
        %1098 = vmatprep.subr.mxu0 0.0
        %1099 = vmatpush1.msra.mxu0 0.0
        %1100 = vmatprep.subr.mxu0 0.0
        %1101 = vmatpush1.msra.mxu0 0.0
        %1102 = vmatprep.subr.mxu0 0.0
        %1103 = vmatpush1.msra.mxu0 0.0
        %1104 = vmatprep.subr.mxu0 0.0
        %1105 = vmatpush1.msra.mxu0 0.0
        %1106 = vmatprep.subr.mxu0 0.0
        %1107 = vmatpush1.msra.mxu0 0.0
        %1108 = vmatprep.subr.mxu0 0.0
        %1109 = vmatpush1.msra.mxu0 0.0
        %1110 = vmatprep.subr.mxu0 0.0
        %1111 = vmatpush1.msra.mxu0 0.0
        %1112 = vmatprep.subr.mxu0 0.0
        %1113 = vmatpush1.msra.mxu0 0.0
        %1114 = vmatprep.subr.mxu0 0.0
        %1115 = vmatpush1.msra.mxu0 0.0
        %1116 = vmatprep.subr.mxu0 0.0
        %1117 = vmatpush1.msra.mxu0 0.0
        %1118 = vmatprep.subr.mxu0 0.0
        %1119 = vmatpush1.msra.mxu0 0.0
        %1120 = vmatprep.subr.mxu0 0.0
        %1121 = vmatpush1.msra.mxu0 0.0
        %1122 = vmatprep.subr.mxu0 0.0
        %1123 = vmatpush1.msra.mxu0 0.0
        %1124 = vmatprep.subr.mxu0 0.0
        %1125 = vmatpush1.msra.mxu0 0.0
        %1126 = vmatprep.subr.mxu0 0.0
        %1127 = vmatpush1.msra.mxu0 0.0
        %1128 = vmatprep.subr.mxu0 0.0
        %1129 = vmatpush1.msra.mxu0 0.0
        %1130 = vmatprep.subr.mxu0 0.0
        %1131 = vmatpush1.msra.mxu0 0.0
        %1132 = vmatprep.subr.mxu0 0.0
        %1133 = vmatpush1.msra.mxu0 0.0
        %1134 = vmatprep.subr.mxu0 0.0
        %1135 = vmatpush1.msra.mxu0 0.0
        %1136 = vmatprep.subr.mxu0 0.0
        %1137 = vmatpush1.msra.mxu0 0.0
        %1138 = vmatprep.subr.mxu0 0.0
        %1139 = vmatpush1.msra.mxu0 0.0
        %1140 = vmatprep.subr.mxu0 0.0
        %1141 = vmatpush1.msra.mxu0 0.0
        %1142 = vmatprep.subr.mxu0 0.0
        %1143 = vmatpush1.msra.mxu0 0.0
        %1144 = vmatprep.subr.mxu0 0.0
        %1145 = vmatpush1.msra.mxu0 0.0
        %1146 = vmatprep.subr.mxu0 0.0
        %1147 = vmatpush1.msra.mxu0 0.0
        %1148 = vmatprep.subr.mxu0 0.0
        %1149 = vmatpush1.msra.mxu0 0.0
        %1150 = vmatprep.subr.mxu0 0.0
        %1151 = vmatpush1.msra.mxu0 0.0
        %1152 = vmatprep.subr.mxu0 0.0
        %1153 = vmatpush1.msra.mxu0 0.0
        %1154 = vmatprep.subr.mxu0 0.0
        %1155 = vmatpush1.msra.mxu0 0.0
        %1156 = vmatprep.subr.mxu0 0.0
        %1157 = vmatpush1.msra.mxu0 0.0
        %1158 = vmatprep.mubr.f32.mxu0 0.0
        %v1159 = vand.u32 %v755, 4294901760
        %1160 = vmatmul.mubr.f32.gmra.mrb[0].mxu0 %v1159
        %v1161 = vpop.f32.mrb[0].mxu0
        %v1162 = vadd.f32 %v1080, %v1161
        %v1163 = vpop.f32.mrb[0].mxu0
        %1164 = vmatprep.mubr.f32.mxu0 0.0
        %v1165 = vand.u32 %v758, 4294901760
        %1166 = vmatmul.mubr.f32.gmra.mrb[0].mxu0 %v1165
        %v1167 = vpop.f32.mrb[0].mxu0
        %v1168 = vadd.f32 %v1088, %v1167
        %v1169 = vpop.f32.mrb[0].mxu0
        %1170 = vdwg.mxu0
        %1171 = vmatprep.subr.mxu0 0.0
        %v1172 = vand.u32 %v738, 4294901760
        %1173 = vmatpush1.msra.mxu0 %v1172
        %1174 = vmatprep.subr.mxu0 0.0
        %1175 = vmatpush1.msra.mxu0 0.0
        %1176 = vmatprep.subr.mxu0 0.0
        %1177 = vmatpush1.msra.mxu0 0.0
        %1178 = vmatprep.subr.mxu0 0.0
        %1179 = vmatpush1.msra.mxu0 0.0
        %1180 = vmatprep.subr.mxu0 0.0
        %1181 = vmatpush1.msra.mxu0 0.0
        %1182 = vmatprep.subr.mxu0 0.0
        %1183 = vmatpush1.msra.mxu0 0.0
        %1184 = vmatprep.subr.mxu0 0.0
        %1185 = vmatpush1.msra.mxu0 0.0
        %1186 = vmatprep.subr.mxu0 0.0
        %1187 = vmatpush1.msra.mxu0 0.0
        %1188 = vmatprep.subr.mxu0 0.0
        %1189 = vmatpush1.msra.mxu0 0.0
        %1190 = vmatprep.subr.mxu0 0.0
        %1191 = vmatpush1.msra.mxu0 0.0
        %1192 = vmatprep.subr.mxu0 0.0
        %1193 = vmatpush1.msra.mxu0 0.0
        %1194 = vmatprep.subr.mxu0 0.0
        %1195 = vmatpush1.msra.mxu0 0.0
        %1196 = vmatprep.subr.mxu0 0.0
        %1197 = vmatpush1.msra.mxu0 0.0
        %1198 = vmatprep.subr.mxu0 0.0
        %1199 = vmatpush1.msra.mxu0 0.0
        %1200 = vmatprep.subr.mxu0 0.0
        %1201 = vmatpush1.msra.mxu0 0.0
        %1202 = vmatprep.subr.mxu0 0.0
        %1203 = vmatpush1.msra.mxu0 0.0
        %1204 = vmatprep.subr.mxu0 0.0
        %1205 = vmatpush1.msra.mxu0 0.0
        %1206 = vmatprep.subr.mxu0 0.0
        %1207 = vmatpush1.msra.mxu0 0.0
        %1208 = vmatprep.subr.mxu0 0.0
        %1209 = vmatpush1.msra.mxu0 0.0
        %1210 = vmatprep.subr.mxu0 0.0
        %1211 = vmatpush1.msra.mxu0 0.0
        %1212 = vmatprep.subr.mxu0 0.0
        %1213 = vmatpush1.msra.mxu0 0.0
        %1214 = vmatprep.subr.mxu0 0.0
        %1215 = vmatpush1.msra.mxu0 0.0
        %1216 = vmatprep.subr.mxu0 0.0
        %1217 = vmatpush1.msra.mxu0 0.0
        %1218 = vmatprep.subr.mxu0 0.0
        %1219 = vmatpush1.msra.mxu0 0.0
        %1220 = vmatprep.subr.mxu0 0.0
        %1221 = vmatpush1.msra.mxu0 0.0
        %1222 = vmatprep.subr.mxu0 0.0
        %1223 = vmatpush1.msra.mxu0 0.0
        %1224 = vmatprep.subr.mxu0 0.0
        %1225 = vmatpush1.msra.mxu0 0.0
        %1226 = vmatprep.subr.mxu0 0.0
        %1227 = vmatpush1.msra.mxu0 0.0
        %1228 = vmatprep.subr.mxu0 0.0
        %1229 = vmatpush1.msra.mxu0 0.0
        %1230 = vmatprep.subr.mxu0 0.0
        %1231 = vmatpush1.msra.mxu0 0.0
        %1232 = vmatprep.subr.mxu0 0.0
        %1233 = vmatpush1.msra.mxu0 0.0
        %1234 = vmatprep.subr.mxu0 0.0
        %1235 = vmatpush1.msra.mxu0 0.0
        %1236 = vmatprep.mubr.f32.mxu0 0.0
        %v1237 = vand.u32 %v755, 4294901760
        %1238 = vmatmul.mubr.f32.gmra.mrb[0].mxu0 %v1237
        %v1239 = vpop.f32.mrb[0].mxu0
        %v1240 = vadd.f32 %v1162, %v1239
        %v1241 = vpop.f32.mrb[0].mxu0
        %1242 = vmatprep.mubr.f32.mxu0 0.0
        %v1243 = vand.u32 %v758, 4294901760
        %1244 = vmatmul.mubr.f32.gmra.mrb[0].mxu0 %v1243
        %v1245 = vpop.f32.mrb[0].mxu0
        %v1246 = vadd.f32 %v1168, %v1245
        %v1247 = vpop.f32.mrb[0].mxu0
        %1248 = vdwg.mxu0
        %v1249 = vxor.u32 %v1240, 2147483648
        %v1250 = vxor.u32 %v1246, 2147483648
        %v1251 = vmul.f32 %v1249, 1.442695
        %v1252 = vpow.pop %v1251
        %v1253 = vmul.f32 %v1250, 1.442695
        %v1254 = vpow.pop %v1253
        %v1255 = vadd.f32 %v1252, 1.0
        %v1256 = vadd.f32 %v1254, 1.0
        %v1257 = vrcp.pop %v1255
        %v1258 = vmul.f32 1.0, %v1257
        %v1259 = vrcp.pop %v1256
        %v1260 = vmul.f32 1.0, %v1259
        %v1261 = vmul.f32 %v260, %v1258
        %v1262 = vmul.f32 %v261, %v1260
        %1263 = vst [vmem:[%s259] sm:$0xff] %v1261
        %1264 = vst [vmem:[%s259 + $0x8] sm:$0xff] %v1262
        %s1265 = sand.u32 %s156, 1
        %s1266 = scalar_lea.sflag [#allocation4], %s1265
        %s1267 = sand.u32 %s156, 1
        %s1268 = smul.addr %s1267, 16
        %s1269 = scalar_lea.vmem [#allocation5], %s1268
        // Predicated region
        $region45: #{tpu_custom_call.1} parent=39 // pred_check
          %p1270 = pneg %p166
        $region46: #{tpu_custom_call.1} parent=39 // pred_check_branch
          %1272 = sbr.rel (%p1270) target = $region48
        $region47: #{tpu_custom_call.1} parent=39 // pred_region
          %s1274 = ssub.s32 256, 256
          %1275 = vsyncadd %s1266, %s1274
          %s1276 = smul.addr %s26, 4
          %s1277 = sadd.s32 %s27, %s1276
          %s1278 = smul.addr %s1277, 128
          %s1279 = scalar_lea.hbm %s5, %s1278
          %s1280 = sshll.u32 %s1269, 4
          %s1281 = int_to_ptr.vmem [resolvable:$true] %s1280
          %1286 = dma.vmem_to_hbm [thread:$0]  %s1281, 256, %s1279, %s1266, 128, 256, 8
        $region48: #{tpu_custom_call.1} parent=39 // pred_fallthru
          _
      $region40: #{tpu_custom_call.1} parent=5 // pred_fallthru
        _
      %p1287 = scmp.le.s32.totalorder 2, %s17
      // Predicated region
      $region49: #{tpu_custom_call.1} parent=5 // pred_check
        %p1288 = pneg %p1287
      $region50: #{tpu_custom_call.1} parent=5 // pred_check_branch
        %1290 = sbr.rel (%p1288) target = $region52
      $region51: #{tpu_custom_call.1} parent=5 // pred_region
        %s1291 = ssub.s32 %s17, 2
        // Predicated region
        $region53: #{tpu_custom_call.1} parent=51 // pred_check
          %p1292 = pneg %p172
        $region54: #{tpu_custom_call.1} parent=51 // pred_check_branch
          %1294 = sbr.rel (%p1292) target = $region56
        $region55: #{tpu_custom_call.1} parent=51 // pred_region
          %s1295 = sand.u32 %s157, 1
          %s1296 = scalar_lea.sflag [#allocation4], %s1295
          %s1297 = sand.u32 %s157, 1
          %s1298 = smul.addr %s1297, 16
          %s1299 = scalar_lea.vmem [#allocation5], %s1298
          %1300 = dma.done %s1296, 256
        $region56: #{tpu_custom_call.1} parent=51 // pred_fallthru
          _
      $region52: #{tpu_custom_call.1} parent=5 // pred_fallthru
        _
    $region6: #{tpu_custom_call.1} parent=1 // loop_footer
      %s21 = sadd.s32 1, %s17
    $region7: #{tpu_custom_call.1} parent=1 // loop_footer_branch
      %16 = sbr.rel target = $region3
    $region8: #{tpu_custom_call.1} parent=1 // loop_exit
      _
    %1301 = vsyncpa [#allocation3], 1
    %s1302 = scalar_lea.sflag [#allocation3], 1
    %1303 = vsyncpa %s1302, 1
    %1304 = vsyncpa [#allocation4], 1
    %s1305 = scalar_lea.sflag [#allocation4], 1
    %1306 = vsyncpa %s1305, 1

</llo_original>
